<compile_context>
chip_gen: v5e
topology: v5e:2x2
jax: 0.10.0
libtpu: 0.0.40
codegen_flags: <defaults>
</compile_context>

<pallas_src>
import jax
import jax.numpy as jnp
from jax.experimental import pallas as pl
from jax.experimental.pallas import tpu as pltpu


def _round_up(x: int, m: int) -> int:
    return ((x + m - 1) // m) * m


def _cdiv(a: int, b: int) -> int:
    return (a + b - 1) // b


def qnet_kernel(xT_ref, w1T_ref, b1_ref, w2T_ref, b2_ref, w3_ref, b3_ref,
                out_ref):
    # Layer 1: (hidden, in_dim) @ (in_dim, TB) -> (hidden, TB).
    # bf16 operands, f32 accumulation on the MXU.
    h1 = jnp.dot(w1T_ref[...], xT_ref[...],
                 preferred_element_type=jnp.float32)
    h1 = jnp.maximum(h1 + b1_ref[...], 0.0)            # f32 bias + ReLU (VPU)

    # Layer 2: (hidden, hidden) @ (hidden, TB) -> (hidden, TB).
    h2 = jnp.dot(w2T_ref[...], h1.astype(jnp.bfloat16),
                 preferred_element_type=jnp.float32)
    h2 = jnp.maximum(h2 + b2_ref[...], 0.0)

    # Layer 3: hidden -> 1 as VPU multiply + sublane reduce (off the MXU).
    # Result is naturally lane-dense: (1, TB).
    q = jnp.sum(h2 * w3_ref[...], axis=0, keepdims=True) + b3_ref[...]
    out_ref[...] = q.astype(out_ref.dtype)


def qnetwork_forward(user, content, params):
    """user: [B, user_dim], content: [B, content_dim] -> [B, 1] Q-value."""
    if user.shape[0] != content.shape[0]:
        raise ValueError(
            f"Batch size mismatch: user.shape={user.shape}, "
            f"content.shape={content.shape}")
    w1, b1, w2, b2, w3, b3 = params
    in_dim, hidden = w1.shape
    user_dim = user.shape[1]
    content_dim = content.shape[1]
    if user_dim + content_dim != in_dim:
        raise ValueError(
            f"Input dim mismatch: user_dim={user_dim}, content_dim={content_dim}, "
            f"expected total={in_dim}")

    B = user.shape[0]

    # ---- layout / dtype plumbing (done once in the wrapper) ----------------
    # bf16 operands for the MXU; biases / layer-3 weight stay f32.
    xT = jnp.concatenate([user, content], axis=1).astype(jnp.bfloat16).T  # (in_dim, B)
    w1T = w1.T.astype(jnp.bfloat16)                       # (hidden, in_dim)
    w2T = w2.T.astype(jnp.bfloat16)                       # (hidden, hidden)
    b1c = jnp.reshape(b1, (hidden, 1)).astype(jnp.float32)
    b2c = jnp.reshape(b2, (hidden, 1)).astype(jnp.float32)
    w3c = jnp.reshape(w3, (hidden, 1)).astype(jnp.float32)
    b3c = jnp.reshape(b3, (1, 1)).astype(jnp.float32)

    # ---- balanced, lane-aligned batch tiling --------------------------------
    TARGET_TB = 1024
    num_tiles = max(1, _cdiv(B, TARGET_TB))
    if num_tiles > 1 and num_tiles % 2 == 1:
        num_tiles += 1                      # even tile count for v7x megacore
    TB = _round_up(_cdiv(B, num_tiles), 128)   # lane-dense batch tile
    B_pad = TB * num_tiles
    if B_pad != B:
        xT = jnp.pad(xT, ((0, 0), (0, B_pad - B)))

    flops = 2 * B_pad * (in_dim * hidden + hidden * hidden + hidden)
    bytes_accessed = (
        2 * (B_pad * in_dim + in_dim * hidden + hidden * hidden)   # bf16 acts + W1 + W2
        + 4 * (3 * hidden + 1)                                     # f32 b1, b2, w3, b3
        + 4 * B_pad)                                               # f32 output

    batch_block = lambda rows: pl.BlockSpec((rows, TB), lambda i: (0, i))
    const_block = lambda shape: pl.BlockSpec(shape, lambda i: (0, 0))

    out_pad = pl.pallas_call(
        qnet_kernel,
        out_shape=jax.ShapeDtypeStruct((1, B_pad), jnp.float32),
        grid=(num_tiles,),
        in_specs=[
            batch_block(in_dim),                 # x^T tile (in_dim, TB)
            const_block((hidden, in_dim)),       # W1^T, resident in VMEM
            const_block((hidden, 1)),            # b1
            const_block((hidden, hidden)),       # W2^T, resident in VMEM
            const_block((hidden, 1)),            # b2
            const_block((hidden, 1)),            # w3 column
            const_block((1, 1)),                 # b3
        ],
        out_specs=batch_block(1),                # lane-dense (1, TB) output tile
        compiler_params=pltpu.CompilerParams(
            dimension_semantics=("parallel",)),
        cost_estimate=pl.CostEstimate(
            flops=flops, transcendentals=0, bytes_accessed=bytes_accessed),
    )(xT, w1T, b1c, w2T, b2c, w3c, b3c)

    # Padded tail columns carry bias-driven junk; slice them off here.
    return out_pad[:, :B].T                      # [B, 1]


def init_params(key, user_dim, content_dim, hidden_dim):
    """Deterministic synthetic init (PyTorch-style uniform bounds), f32."""
    ks = jax.random.split(key, 6)
    in_dim = user_dim + content_dim

    def u(k, shape, fan_in):
        bound = 1.0 / jnp.sqrt(fan_in)
        return jax.random.uniform(k, shape, jnp.float32, -bound, bound)

    w1 = u(ks[0], (in_dim, hidden_dim), in_dim)          # (in, hidden)
    b1 = u(ks[1], (hidden_dim,), in_dim)
    w2 = u(ks[2], (hidden_dim, hidden_dim), hidden_dim)  # (hidden, hidden)
    b2 = u(ks[3], (hidden_dim,), hidden_dim)
    w3 = u(ks[4], (hidden_dim, 1), hidden_dim)           # (hidden, 1)
    b3 = u(ks[5], (1,), hidden_dim)
    return (w1, b1, w2, b2, w3, b3)


def reference_forward(user, content, params):
    """Pure-f32 JAX reference of the PyTorch module."""
    w1, b1, w2, b2, w3, b3 = params
    x = jnp.concatenate([user, content], axis=1)
    h1 = jnp.maximum(x @ w1 + b1, 0.0)
    h2 = jnp.maximum(h1 @ w2 + b2, 0.0)
    return h2 @ w3 + b3


if __name__ == "__main__":
    user_dim, content_dim, hidden_dim = 8, 8, 32

    key = jax.random.PRNGKey(0)
    k_u, k_c, k_p = jax.random.split(key, 3)
    params = init_params(k_p, user_dim, content_dim, hidden_dim)

    # Small case (single 128-wide tile; exercises the padded-tail path).
    batch = 4
    user = jax.random.normal(k_u, (batch, user_dim), jnp.float32)
    content = jax.random.normal(k_c, (batch, content_dim), jnp.float32)

    out = qnetwork_forward(user, content, params)
    out = jax.block_until_ready(out)
    ref = reference_forward(user, content, params)
    assert out.shape == (batch, 1)
    # bf16 MXU operands -> loosened tolerance vs. the f32 reference.
    assert jnp.allclose(out, ref, atol=2e-2, rtol=2e-2), (out, ref)

    # Larger case (4 balanced tiles of 640; multi-tile pipelined grid).
    big_batch = 2500
    k_u2, k_c2 = jax.random.split(jax.random.PRNGKey(1), 2)
    user2 = jax.random.normal(k_u2, (big_batch, user_dim), jnp.float32)
    content2 = jax.random.normal(k_c2, (big_batch, content_dim), jnp.float32)

    out2 = qnetwork_forward(user2, content2, params)
    out2 = jax.block_until_ready(out2)
    ref2 = reference_forward(user2, content2, params)
    assert out2.shape == (big_batch, 1)
    assert jnp.allclose(out2, ref2, atol=3e-2, rtol=3e-2)

    print("KERNEL_OK")
</pallas_src>

<mosaic_0001>
module attributes {stable_mosaic.version = 11 : i64} {
  func.func @qnet_kernel(%arg0: i32, %arg1: memref<16x128xbf16, #tpu.memory_space<vmem>>, %arg2: memref<32x16xbf16, #tpu.memory_space<vmem>>, %arg3: memref<32x1xf32, #tpu.memory_space<vmem>>, %arg4: memref<32x32xbf16, #tpu.memory_space<vmem>>, %arg5: memref<32x1xf32, #tpu.memory_space<vmem>>, %arg6: memref<32x1xf32, #tpu.memory_space<vmem>>, %arg7: memref<1x1xf32, #tpu.memory_space<vmem>>, %arg8: memref<1x128xf32, #tpu.memory_space<vmem>>) attributes {dimension_semantics = [#tpu.dimension_semantics<parallel>], iteration_bounds = array<i64: 1>, scalar_prefetch = 0 : i64, scratch_operands = 0 : i64, tpu.core_type = #tpu.core_type<tc>, window_params = [{transform_indices = @transform_0, window_bounds = array<i64: 16, 128>}, {pipeline_mode = #tpu.pipeline_mode<synchronous>, transform_indices = @transform_1, window_bounds = array<i64: 32, 16>}, {pipeline_mode = #tpu.pipeline_mode<synchronous>, transform_indices = @transform_2, window_bounds = array<i64: 32, 1>}, {pipeline_mode = #tpu.pipeline_mode<synchronous>, transform_indices = @transform_3, window_bounds = array<i64: 32, 32>}, {pipeline_mode = #tpu.pipeline_mode<synchronous>, transform_indices = @transform_4, window_bounds = array<i64: 32, 1>}, {pipeline_mode = #tpu.pipeline_mode<synchronous>, transform_indices = @transform_5, window_bounds = array<i64: 32, 1>}, {pipeline_mode = #tpu.pipeline_mode<synchronous>, transform_indices = @transform_6, window_bounds = array<i64: 1, 1>}, {transform_indices = @transform_7, window_bounds = array<i64: 1, 128>}]} {
    %c0 = arith.constant 0 : index
    %c0_0 = arith.constant 0 : index
    %0 = vector.load %arg2[%c0, %c0_0] : memref<32x16xbf16, #tpu.memory_space<vmem>>, vector<32x16xbf16>
    %c0_1 = arith.constant 0 : index
    %c0_2 = arith.constant 0 : index
    %1 = vector.load %arg1[%c0_1, %c0_2] : memref<16x128xbf16, #tpu.memory_space<vmem>>, vector<16x128xbf16>
    %cst = arith.constant dense<0.000000e+00> : vector<32x128xf32>
    %2 = tpu.matmul %0, %1, %cst {dimension_numbers = #tpu.dot_dimension_numbers<[1], [0], [0], [1], [0, 0, 1, 1], [], []>} : vector<32x16xbf16>, vector<16x128xbf16>, vector<32x128xf32> -> vector<32x128xf32>
    %c0_3 = arith.constant 0 : index
    %c0_4 = arith.constant 0 : index
    %3 = vector.load %arg3[%c0_3, %c0_4] : memref<32x1xf32, #tpu.memory_space<vmem>>, vector<32x1xf32>
    %4 = vector.broadcast %3 : vector<32x1xf32> to vector<32x128xf32>
    %5 = arith.addf %2, %4 : vector<32x128xf32>
    %cst_5 = arith.constant 0.000000e+00 : f32
    %6 = vector.broadcast %cst_5 : f32 to vector<32x128xf32>
    %7 = arith.maximumf %5, %6 : vector<32x128xf32>
    %c0_6 = arith.constant 0 : index
    %c0_7 = arith.constant 0 : index
    %8 = vector.load %arg4[%c0_6, %c0_7] : memref<32x32xbf16, #tpu.memory_space<vmem>>, vector<32x32xbf16>
    %9 = arith.truncf %7 : vector<32x128xf32> to vector<32x128xbf16>
    %cst_8 = arith.constant dense<0.000000e+00> : vector<32x128xf32>
    %10 = tpu.matmul %8, %9, %cst_8 {dimension_numbers = #tpu.dot_dimension_numbers<[1], [0], [0], [1], [0, 0, 1, 1], [], []>} : vector<32x32xbf16>, vector<32x128xbf16>, vector<32x128xf32> -> vector<32x128xf32>
    %c0_9 = arith.constant 0 : index
    %c0_10 = arith.constant 0 : index
    %11 = vector.load %arg5[%c0_9, %c0_10] : memref<32x1xf32, #tpu.memory_space<vmem>>, vector<32x1xf32>
    %12 = vector.broadcast %11 : vector<32x1xf32> to vector<32x128xf32>
    %13 = arith.addf %10, %12 : vector<32x128xf32>
    %cst_11 = arith.constant 0.000000e+00 : f32
    %14 = vector.broadcast %cst_11 : f32 to vector<32x128xf32>
    %15 = arith.maximumf %13, %14 : vector<32x128xf32>
    %c0_12 = arith.constant 0 : index
    %c0_13 = arith.constant 0 : index
    %16 = vector.load %arg6[%c0_12, %c0_13] : memref<32x1xf32, #tpu.memory_space<vmem>>, vector<32x1xf32>
    %17 = vector.broadcast %16 : vector<32x1xf32> to vector<32x128xf32>
    %18 = arith.mulf %15, %17 : vector<32x128xf32>
    %cst_14 = arith.constant dense<0.000000e+00> : vector<128xf32>
    %19 = vector.multi_reduction <add>, %18, %cst_14 [0] : vector<32x128xf32> to vector<128xf32>
    %20 = vector.shape_cast %19 : vector<128xf32> to vector<1x128xf32>
    %c0_15 = arith.constant 0 : index
    %c0_16 = arith.constant 0 : index
    %21 = vector.load %arg7[%c0_15, %c0_16] : memref<1x1xf32, #tpu.memory_space<vmem>>, vector<1x1xf32>
    %22 = vector.broadcast %21 : vector<1x1xf32> to vector<1x128xf32>
    %23 = arith.addf %20, %22 : vector<1x128xf32>
    %c0_17 = arith.constant 0 : index
    %c0_18 = arith.constant 0 : index
    %24 = vector.load %arg8[%c0_17, %c0_18] : memref<1x128xf32, #tpu.memory_space<vmem>>, vector<1x128xf32>
    tpu.vector_store %arg8[%c0_17, %c0_18], %23 {strides = array<i32>} : memref<1x128xf32, #tpu.memory_space<vmem>>, vector<1x128xf32>,
    return
  }
  func.func @transform_0(%arg0: i32) -> (i32, i32) {
    %c0_i32 = arith.constant 0 : i32
    %c0_i32_0 = arith.constant 0 : i32
    return %c0_i32, %arg0 : i32, i32
  }
  func.func @transform_1(%arg0: i32) -> (i32, i32) {
    %c0_i32 = arith.constant 0 : i32
    %c0_i32_0 = arith.constant 0 : i32
    %c0_i32_1 = arith.constant 0 : i32
    return %c0_i32, %c0_i32_0 : i32, i32
  }
  func.func @transform_2(%arg0: i32) -> (i32, i32) {
    %c0_i32 = arith.constant 0 : i32
    %c0_i32_0 = arith.constant 0 : i32
    %c0_i32_1 = arith.constant 0 : i32
    return %c0_i32, %c0_i32_0 : i32, i32
  }
  func.func @transform_3(%arg0: i32) -> (i32, i32) {
    %c0_i32 = arith.constant 0 : i32
    %c0_i32_0 = arith.constant 0 : i32
    %c0_i32_1 = arith.constant 0 : i32
    return %c0_i32, %c0_i32_0 : i32, i32
  }
  func.func @transform_4(%arg0: i32) -> (i32, i32) {
    %c0_i32 = arith.constant 0 : i32
    %c0_i32_0 = arith.constant 0 : i32
    %c0_i32_1 = arith.constant 0 : i32
    return %c0_i32, %c0_i32_0 : i32, i32
  }
  func.func @transform_5(%arg0: i32) -> (i32, i32) {
    %c0_i32 = arith.constant 0 : i32
    %c0_i32_0 = arith.constant 0 : i32
    %c0_i32_1 = arith.constant 0 : i32
    return %c0_i32, %c0_i32_0 : i32, i32
  }
  func.func @transform_6(%arg0: i32) -> (i32, i32) {
    %c0_i32 = arith.constant 0 : i32
    %c0_i32_0 = arith.constant 0 : i32
    %c0_i32_1 = arith.constant 0 : i32
    return %c0_i32, %c0_i32_0 : i32, i32
  }
  func.func @transform_7(%arg0: i32) -> (i32, i32) {
    %c0_i32 = arith.constant 0 : i32
    %c0_i32_0 = arith.constant 0 : i32
    return %c0_i32, %arg0 : i32, i32
  }
}

</mosaic_0001>

<llo_original>
// kernel: tpu_custom_call.1
$region0: #{tpu_custom_call.1}
  #allocation0 [shape = 'u32[]', space=smem, size = 0x4, offset = 0x4, fixed_abs, tag = 'smem constant byte address 0x4 - core index']
  #allocation1 [shape = 'u32[72,128]{1,0:T(1,128)}', space=vmem, size = 0x9000, scoped, tag = 'internal scratch']
  #allocation2 [shape = 'f32[1,1]{1,0:T(1,128)S(1)}', space=vmem, size = 0x200, scoped, tag = 'scoped memory for tpu_custom_call.1']
  %s0 = inlined_call_operand.vmem [shape: bf16[16,128], index: 0, kind: input, shape index: {}]
  %s1 = inlined_call_operand.vmem [shape: bf16[32,16], index: 1, kind: input, shape index: {}]
  %s2 = inlined_call_operand.vmem [shape: f32[32,1], index: 2, kind: input, shape index: {}]
  %s3 = inlined_call_operand.vmem [shape: bf16[32,32], index: 3, kind: input, shape index: {}]
  %s4 = inlined_call_operand.vmem [shape: f32[32,1], index: 4, kind: input, shape index: {}]
  %s5 = inlined_call_operand.vmem [shape: f32[32,1], index: 5, kind: input, shape index: {}]
  %s6 = inlined_call_operand.<no memory space> [shape: f32[1,1], index: 6, kind: input, shape index: {}]
  %s7 = inlined_call_operand.hbm [shape: f32[1,128], index: 7, kind: output, shape index: {}]
  %s8 = sld [smem:[#allocation0]]
  $region38: #{tpu_custom_call.1} parent=0
    _
  %s10 = ssub.s32 1, %s8
  %s11 = scalar_select 0, %s10, %s8
  %v12 = vstv %s6
  %13 = vst [vmem:[#allocation2] sm:$0x1] %v12
  $region1: #{tpu_custom_call.1} parent=0
    #allocation3 [shape = 'u8[512]{0}', space=vmem, size = 0x400, scoped, tag = 'output window, operand 0, single buffered']
    #allocation4 [shape = 's32[1]{0}', space=sflag, size = 0x4, scoped, tag = 'scoped memory for tpu_custom_call.1']
    %14 = vsyncpa [#allocation4], 0
    // Predicated region
    $region2: #{tpu_custom_call.1} parent=1 // pred_check
      _
    $region3: #{tpu_custom_call.1} parent=1 // pred_check_branch
      %16 = sbr.rel (0) target = $region5
    $region4: #{tpu_custom_call.1} parent=1 // pred_region
      _
    $region5: #{tpu_custom_call.1} parent=1 // pred_fallthru
      _
    // Predicated region
    $region6: #{tpu_custom_call.1} parent=1 // pred_check
      _
    $region7: #{tpu_custom_call.1} parent=1 // pred_check_branch
      %18 = sbr.rel (0) target = $region9
    $region8: #{tpu_custom_call.1} parent=1 // pred_region
      _
    $region9: #{tpu_custom_call.1} parent=1 // pred_fallthru
      _
    // Predicated region
    $region10: #{tpu_custom_call.1} parent=1 // pred_check
      _
    $region11: #{tpu_custom_call.1} parent=1 // pred_check_branch
      %20 = sbr.rel (0) target = $region13
    $region12: #{tpu_custom_call.1} parent=1 // pred_region
      _
    $region13: #{tpu_custom_call.1} parent=1 // pred_fallthru
      _
    // Predicated region
    $region14: #{tpu_custom_call.1} parent=1 // pred_check
      _
    $region15: #{tpu_custom_call.1} parent=1 // pred_check_branch
      %22 = sbr.rel (0) target = $region17
    $region16: #{tpu_custom_call.1} parent=1 // pred_region
      _
    $region17: #{tpu_custom_call.1} parent=1 // pred_fallthru
      _
    // Predicated region
    $region18: #{tpu_custom_call.1} parent=1 // pred_check
      _
    $region19: #{tpu_custom_call.1} parent=1 // pred_check_branch
      %24 = sbr.rel (0) target = $region21
    $region20: #{tpu_custom_call.1} parent=1 // pred_region
      _
    $region21: #{tpu_custom_call.1} parent=1 // pred_fallthru
      _
    // Predicated region
    $region22: #{tpu_custom_call.1} parent=1 // pred_check
      _
    $region23: #{tpu_custom_call.1} parent=1 // pred_check_branch
      %26 = sbr.rel (0) target = $region25
    $region24: #{tpu_custom_call.1} parent=1 // pred_region
      _
    $region25: #{tpu_custom_call.1} parent=1 // pred_fallthru
      _
    // Predicated region
    $region26: #{tpu_custom_call.1} parent=1 // pred_check
      _
    $region27: #{tpu_custom_call.1} parent=1 // pred_check_branch
      %28 = sbr.rel (0) target = $region29
    $region28: #{tpu_custom_call.1} parent=1 // pred_region
      _
    $region29: #{tpu_custom_call.1} parent=1 // pred_fallthru
      _
    %v30 = vld [vmem:[%s1] sm:$0xf]
    %v31 = vld [vmem:[%s1 + $0x4] sm:$0xf]
    %v32 = vld [vmem:[%s1 + $0x8] sm:$0xf]
    %v33 = vld [vmem:[%s1 + $0xc] sm:$0xf]
    %v34 = vld [vmem:[%s0] sm:$0xf]
    %v35 = vld [vmem:[%s0 + $0x4] sm:$0xf]
    %v36 = vld [vmem:[%s2] sm:$0xff]
    %v37 = vld [vmem:[%s2 + $0x8] sm:$0xff]
    %v38 = vld [vmem:[%s2 + $0x10] sm:$0xff]
    %v39 = vld [vmem:[%s2 + $0x18] sm:$0xff]
    %41 = vset.pattern.permute.xlu0 0
    %42 = vperm.xlu0 %41, %v36
    %v43 = vpop.permute.xlu0 %42
    %46 = vset.pattern.permute.xlu0 0
    %47 = vperm.xlu0 %46, %v37
    %v48 = vpop.permute.xlu0 %47
    %51 = vset.pattern.permute.xlu0 0
    %52 = vperm.xlu0 %51, %v38
    %v53 = vpop.permute.xlu0 %52
    %56 = vset.pattern.permute.xlu0 0
    %57 = vperm.xlu0 %56, %v39
    %v58 = vpop.permute.xlu0 %57
    %v64 = vunpack.c.l.b16 %v30
    %v65 = vunpack.c.l.b16 %v31
    %v66 = vunpack.c.l.b16 %v32
    %v67 = vunpack.c.l.b16 %v33
    %v68 = vpack.c.b16 %v65, %v64
    %v69 = vpack.c.b16 %v67, %v66
    %v72 = vunpack.c.l.b16 %v34
    %v73 = vunpack.c.l.b16 %v35
    %v74 = vpack.c.b16 %v73, %v72
    %vm76 = vcmask 130048
    %v78 = vsel %vm76, %v68, 0
    %v81 = vsel %vm76, %v69, 0
    %83 = vmatpush.bf16.msra.mxu0 0
    %84 = vmatpush.bf16.msra.mxu0 0
    %85 = vmatpush.bf16.msra.mxu0 0
    %86 = vmatpush.bf16.msra.mxu0 0
    %87 = vmatpush.bf16.msra.mxu0 0
    %88 = vmatpush.bf16.msra.mxu0 0
    %89 = vmatpush.bf16.msra.mxu0 0
    %90 = vmatpush.bf16.msra.mxu0 %v74
    %91 = vmatmul.bf16.gmra.mxu0 %v78
    %v92 = vpop.f32.mrf.mxu0
    %v93 = vadd.f32 %v43, %v92
    %v94 = vpop.f32.mrf.mxu0
    %v95 = vadd.f32 %v48, %v94
    %96 = vmatmul.bf16.gmra.mxu0 %v81
    %v97 = vpop.f32.mrf.mxu0
    %v98 = vadd.f32 %v53, %v97
    %v99 = vpop.f32.mrf.mxu0
    %v100 = vadd.f32 %v58, %v99
    %101 = vdwg.mxu0
    %v102 = vmax.f32 %v93, 0.0
    %v103 = vmax.f32 %v95, 0.0
    %v104 = vmax.f32 %v98, 0.0
    %v105 = vmax.f32 %v100, 0.0
    %v106 = vld [vmem:[%s3] sm:$0xf]
    %v107 = vld [vmem:[%s3 + $0x4] sm:$0xf]
    %v108 = vld [vmem:[%s3 + $0x8] sm:$0xf]
    %v109 = vld [vmem:[%s3 + $0xc] sm:$0xf]
    %v110 = vpack.c.bf16 %v103, %v102
    %v111 = vpack.c.bf16 %v105, %v104
    %v112 = vld [vmem:[%s4] sm:$0xff]
    %v113 = vld [vmem:[%s4 + $0x8] sm:$0xff]
    %v114 = vld [vmem:[%s4 + $0x10] sm:$0xff]
    %v115 = vld [vmem:[%s4 + $0x18] sm:$0xff]
    %117 = vset.pattern.permute.xlu0 0
    %118 = vperm.xlu0 %117, %v112
    %v119 = vpop.permute.xlu0 %118
    %122 = vset.pattern.permute.xlu0 0
    %123 = vperm.xlu0 %122, %v113
    %v124 = vpop.permute.xlu0 %123
    %127 = vset.pattern.permute.xlu0 0
    %128 = vperm.xlu0 %127, %v114
    %v129 = vpop.permute.xlu0 %128
    %132 = vset.pattern.permute.xlu0 0
    %133 = vperm.xlu0 %132, %v115
    %v134 = vpop.permute.xlu0 %133
    %v140 = vunpack.c.l.b16 %v106
    %v141 = vunpack.c.l.b16 %v107
    %v142 = vunpack.c.l.b16 %v108
    %v143 = vunpack.c.l.b16 %v109
    %v144 = vpack.c.b16 %v141, %v140
    %v145 = vpack.c.b16 %v143, %v142
    %vm146 = vcmask 261120
    %v148 = vsel %vm146, %v144, 0
    %v151 = vsel %vm146, %v145, 0
    %153 = vmatpush.bf16.msra.mxu0 0
    %154 = vmatpush.bf16.msra.mxu0 0
    %155 = vmatpush.bf16.msra.mxu0 0
    %156 = vmatpush.bf16.msra.mxu0 0
    %157 = vmatpush.bf16.msra.mxu0 0
    %158 = vmatpush.bf16.msra.mxu0 0
    %159 = vmatpush.bf16.msra.mxu0 %v111
    %160 = vmatpush.bf16.msra.mxu0 %v110
    %161 = vmatmul.bf16.gmra.mxu0 %v148
    %v162 = vpop.f32.mrf.mxu0
    %v163 = vadd.f32 %v119, %v162
    %v164 = vpop.f32.mrf.mxu0
    %v165 = vadd.f32 %v124, %v164
    %166 = vmatmul.bf16.gmra.mxu0 %v151
    %v167 = vpop.f32.mrf.mxu0
    %v168 = vadd.f32 %v129, %v167
    %v169 = vpop.f32.mrf.mxu0
    %v170 = vadd.f32 %v134, %v169
    %171 = vdwg.mxu0
    %v172 = vmax.f32 %v163, 0.0
    %v173 = vmax.f32 %v165, 0.0
    %v174 = vmax.f32 %v168, 0.0
    %v175 = vmax.f32 %v170, 0.0
    %v176 = vld [vmem:[%s5] sm:$0xff]
    %v177 = vld [vmem:[%s5 + $0x8] sm:$0xff]
    %v178 = vld [vmem:[%s5 + $0x10] sm:$0xff]
    %v179 = vld [vmem:[%s5 + $0x18] sm:$0xff]
    %181 = vset.pattern.permute.xlu0 0
    %182 = vperm.xlu0 %181, %v176
    %v183 = vpop.permute.xlu0 %182
    %186 = vset.pattern.permute.xlu0 0
    %187 = vperm.xlu0 %186, %v177
    %v188 = vpop.permute.xlu0 %187
    %191 = vset.pattern.permute.xlu0 0
    %192 = vperm.xlu0 %191, %v178
    %v193 = vpop.permute.xlu0 %192
    %196 = vset.pattern.permute.xlu0 0
    %197 = vperm.xlu0 %196, %v179
    %v198 = vpop.permute.xlu0 %197
    %v200 = vmul.f32 %v172, %v183
    %v201 = vmul.f32 %v173, %v188
    %v202 = vmul.f32 %v174, %v193
    %v203 = vmul.f32 %v175, %v198
    %v204 = vadd.f32 %v200, %v201
    %v205 = vadd.f32 %v204, %v202
    %v206 = vadd.f32 %v205, %v203
    %v207 = vrot.slane %v206, 4
    %v208 = vadd.f32 %v206, %v207
    %v209 = vrot.slane %v208, 2
    %v210 = vadd.f32 %v208, %v209
    %v211 = vrot.slane %v210, 1
    %v212 = vadd.f32 %v210, %v211
    %v213 = vld [vmem:[#allocation2] sm:$0x1]
    %215 = vset.pattern.permute.xlu0 0
    %216 = vperm.xlu0 %215, %v213
    %v217 = vpop.permute.xlu0 %216
    %v219 = vperm.slane %v217, 0
    %v220 = vadd.f32 %v212, %v219
    %221 = vst [vmem:[#allocation3] sm:$0x1] %v220
    // Predicated region
    $region30: #{tpu_custom_call.1} parent=1 // pred_check
      _
    $region31: #{tpu_custom_call.1} parent=1 // pred_check_branch
      %223 = sbr.rel (0) target = $region33
    $region32: #{tpu_custom_call.1} parent=1 // pred_region
      %225 = vsyncadd [#allocation4], 0
      %s227 = sshll.u32 [#allocation3], 4
      %s228 = int_to_ptr.vmem [resolvable:$true] %s227
      %s229 = sshll.u32 %s7, 4
      %s230 = int_to_ptr.hbm [resolvable:$true] %s229
      %232 = dma.vmem_to_hbm [thread:$0]  %s228, 16, %s230, [#allocation4]
    $region33: #{tpu_custom_call.1} parent=1 // pred_fallthru
      _
    // Predicated region
    $region34: #{tpu_custom_call.1} parent=1 // pred_check
      _
    $region35: #{tpu_custom_call.1} parent=1 // pred_check_branch
      %234 = sbr.rel (0) target = $region37
    $region36: #{tpu_custom_call.1} parent=1 // pred_region
      %236 = dma.done [#allocation4], 16
    $region37: #{tpu_custom_call.1} parent=1 // pred_fallthru
      _
    %237 = vsyncpa [#allocation4], 1

</llo_original>
